<compile_context>
chip_gen: v7x
topology: tpu7x:2x2x1
jax: 0.10.0
libtpu: 0.0.40
codegen_flags: <defaults>
</compile_context>

<pallas_src>
import jax
import jax.numpy as jnp
from jax.experimental import pallas as pl
from jax.experimental.pallas import tpu as pltpu

_LANE = 128
_SUBLANE = 8


def _round_up(v, m):
    return ((v + m - 1) // m) * m


# --------------------------------------------------------------------------
# K-tiling plan (done once at init)
# --------------------------------------------------------------------------
def _plan_k_tiling(K, N_pad, L, *, tile_budget_bytes=24 * 1024 * 1024,
                   max_tk=8192):
    """Pick (Kp, tk, nk).  Single-step fast path (nk==1, tk==K) whenever the
    whole weight fits in the double-buffered VMEM tile budget."""
    L_lanes = _round_up(L, _LANE)
    # double-buffered per-K-element bytes: bf16 w row + f32 x column
    per_k = 2 * (L_lanes * 2 + N_pad * 4)
    tk_cap = max(_LANE, (tile_budget_bytes // per_k) // _LANE * _LANE)
    if K <= tk_cap:
        return K, K, 1                       # whole K in one tile, no K padding
    tk = min(tk_cap, max_tk)
    Kp = _round_up(K, tk)
    return Kp, tk, Kp // tk


def prepare_kp_head_params(w, b, n_selected):
    """ONE-TIME prep (hoisted out of the per-call path): pad w's K dim to the
    tile plan and cast to bf16 so the kernel's streaming read is the only
    per-call w traffic."""
    K, L = w.shape
    N_pad = _round_up(max(int(n_selected), 1), _SUBLANE)
    Kp, tk, nk = _plan_k_tiling(K, N_pad, L)
    if Kp != K:
        w = jnp.pad(w, ((0, Kp - K), (0, 0)))      # zero rows: padded x cols contribute 0
    w_bf16 = w.astype(jnp.bfloat16)
    b = jnp.asarray(b, jnp.float32).reshape(1, L)
    plan = dict(K=K, Kp=Kp, tk=tk, nk=nk, N_pad=N_pad, L=L)
    return w_bf16, b, plan


# --------------------------------------------------------------------------
# Fused kernel: tensor2image + K-tiled matmul accumulate + masked-MSE epilogue
# --------------------------------------------------------------------------
def _make_kernel(n_valid, L):
    inv_denom = 1.0 / float(n_valid * L)

    def kernel(x_ref, w_ref, b_ref, tgt_ref, loss_ref, acc_ref):
        k = pl.program_id(0)

        @pl.when(k == 0)
        def _init():
            acc_ref[...] = jnp.zeros_like(acc_ref)

        # tensor2image fused in-kernel: [-1,1] -> [0,255]  (VPU work, hidden
        # under the w DMA / MXU of the matmul).
        img = jnp.clip(x_ref[...] * 127.5 + 127.5, 0.0, 255.0)

        # Landmark-head matmul tile: bf16 MXU inputs, f32 accumulation.
        acc_ref[...] += jnp.dot(
            img.astype(jnp.bfloat16), w_ref[...],
            preferred_element_type=jnp.float32)

        @pl.when(k == pl.num_programs(0) - 1)
        def _epilogue():
            pred = acc_ref[...] + b_ref[...]
            diff = pred - tgt_ref[...]
            # mask the sublane-padded rows; F.mse_loss mean over N*L real elems
            row = jax.lax.broadcasted_iota(jnp.int32, diff.shape, 0)
            sq = jnp.where(row < n_valid, diff * diff, 0.0)
            loss_ref[...] = (jnp.sum(sq) * inv_denom).reshape(1, 1)

    return kernel


def fused_kp_loss(x_sel, w_bf16, b, tgt_sel, n_valid, plan):
    """x_sel: [N_pad, Kp] f32 (raw, pre-tensor2image), w_bf16: [Kp, L] bf16,
    b: [1, L] f32, tgt_sel: [N_pad, L] f32."""
    N_pad, Kp, tk, nk, L = (plan["N_pad"], plan["Kp"], plan["tk"],
                            plan["nk"], plan["L"])
    L_lanes = _round_up(L, _LANE)
    tk_lanes = _round_up(tk, _LANE)

    # VMEM footprint (v7x has only 64 MiB / TC; derive, don't guess):
    vmem_bytes = (
        2 * (tk * L_lanes * 2)          # double-buffered bf16 w tile (dominant)
        + 2 * (N_pad * tk_lanes * 4)    # double-buffered f32 x tile
        + 2 * (N_pad * L_lanes * 4)     # resident tgt + f32 accumulator
        + 2 * (L_lanes * 4)             # bias + loss output
        + (4 << 20))                    # compiler scratch slack
    vmem_limit = int(min(max(vmem_bytes, 8 << 20), 48 << 20))

    cost = pl.CostEstimate(
        flops=2 * N_pad * Kp * L,
        transcendentals=0,
        bytes_accessed=Kp * L * 2 + N_pad * Kp * 4 + N_pad * L * 4 + L * 4)

    return pl.pallas_call(
        _make_kernel(n_valid, L),
        out_shape=jax.ShapeDtypeStruct((1, 1), jnp.float32),
        grid=(nk,),
        in_specs=[
            pl.BlockSpec((N_pad, tk), lambda k: (0, k)),  # selected images, K-tiled
            pl.BlockSpec((tk, L), lambda k: (k, 0)),      # bf16 weights, K-tiled
            pl.BlockSpec((1, L), lambda k: (0, 0)),       # bias, resident
            pl.BlockSpec((N_pad, L), lambda k: (0, 0)),   # targets, resident
        ],
        out_specs=pl.BlockSpec((1, 1), lambda k: (0, 0)),
        scratch_shapes=[pltpu.VMEM((N_pad, L), jnp.float32)],
        compiler_params=pltpu.CompilerParams(
            dimension_semantics=("arbitrary",),           # K is a reduction axis
            vmem_limit_bytes=vmem_limit),
        cost_estimate=cost,
    )(x_sel, w_bf16, b, tgt_sel)


# --------------------------------------------------------------------------
# Forward pass (mirrors KPLossTrain.forward)
# --------------------------------------------------------------------------
def kp_loss_train_forward(x, extra_info, w_bf16, b, plan):
    target_lm, sel = extra_info            # ([B, 68, 2], [N] int)
    B, C, H, W = x.shape
    K = C * H * W
    assert K == plan["K"]
    L = plan["L"]
    N = sel.shape[0]
    N_pad, Kp = plan["N_pad"], plan["Kp"]

    # x[extra_info[1]] first: gather only the N selected rows (tensor2image
    # commutes with row selection and is applied in-kernel on those rows).
    x_sel = jnp.take(x.reshape(B, K), sel, axis=0)                       # [N, K]

    # get_landmarks: synthetic head predicts one face per image, so
    # image_ids (= x_indices) is arange(N); targets = extra_info[0][x_indices].
    x_indices = jnp.arange(N, dtype=jnp.int32)
    tgt_sel = jnp.take(target_lm.reshape(target_lm.shape[0], L),
                       x_indices, axis=0)                                # [N, L]

    # Pad rows to full sublanes (masked out of the loss in-kernel) and K to the
    # tile plan (padded w rows are zero so the padded columns contribute 0).
    x_sel = jnp.pad(x_sel, ((0, N_pad - N), (0, Kp - K)))
    tgt_sel = jnp.pad(tgt_sel, ((0, N_pad - N), (0, 0)))

    loss = fused_kp_loss(x_sel, w_bf16, b, tgt_sel, N, plan)
    return loss[0, 0]


# --------------------------------------------------------------------------
# Pure-JAX reference of the same data flow (for a sanity check)
# --------------------------------------------------------------------------
def _reference_loss(x, target_lm, sel, w, b):
    B, C, H, W = x.shape
    K = C * H * W
    L = target_lm.shape[1] * target_lm.shape[2]
    img = jnp.clip(x.reshape(B, K) * 127.5 + 127.5, 0.0, 255.0)
    img_sel = jnp.take(img, sel, axis=0)
    pred = img_sel @ w + b.reshape(1, L)
    tgt = target_lm.reshape(B, L)[: sel.shape[0]]
    return jnp.mean((pred - tgt) ** 2)


if __name__ == "__main__":
    key = jax.random.PRNGKey(0)
    k1, k2, k3, k4 = jax.random.split(key, 4)

    B, C, H, W = 2, 3, 16, 16          # small NCHW input, like a face crop
    N_LM = 68                          # 68 landmarks, 2 coords each
    Kdim = C * H * W
    L = N_LM * 2

    # deterministic example inputs
    x = jax.random.normal(k1, (B, C, H, W), dtype=jnp.float32)            # [-1,1]-ish
    target_landmarks = jax.random.uniform(k2, (B, N_LM, 2),
                                          dtype=jnp.float32) * 255.0
    sel_indices = jnp.array([1, 0], dtype=jnp.int32)                      # extra_info[1]
    extra_info = (target_landmarks, sel_indices)

    # deterministic synthetic landmark-head parameters
    w = jax.random.normal(k3, (Kdim, L), dtype=jnp.float32) * 0.01
    b = jax.random.normal(k4, (1, L), dtype=jnp.float32)

    # One-time prep (pad + bf16 cast hoisted out of the per-call path).
    w_bf16, b_f32, plan = prepare_kp_head_params(w, b, sel_indices.shape[0])

    fwd = jax.jit(lambda xx, ei: kp_loss_train_forward(xx, ei, w_bf16, b_f32, plan))
    loss = fwd(x, extra_info)
    jax.block_until_ready(loss)

    # sanity check vs pure-JAX f32 reference (loose tol: kernel uses bf16 w)
    ref = _reference_loss(x, target_landmarks, sel_indices, w, b)
    jax.block_until_ready(ref)
    if abs(float(loss) - float(ref)) > 5e-2 * abs(float(ref)) + 1.0:
        raise AssertionError(f"mismatch: kernel={float(loss)} ref={float(ref)}")

    print("KERNEL_OK")
</pallas_src>

<mosaic_0001>
module attributes {stable_mosaic.version = 11 : i64} {
  func.func @kernel(%arg0: i32, %arg1: memref<8x768xf32, #tpu.memory_space<vmem>>, %arg2: memref<768x136xbf16, #tpu.memory_space<vmem>>, %arg3: memref<1x136xf32, #tpu.memory_space<vmem>>, %arg4: memref<8x136xf32, #tpu.memory_space<vmem>>, %arg5: memref<1x1xf32, #tpu.memory_space<vmem>>, %arg6: memref<8x136xf32, #tpu.memory_space<vmem>>) attributes {dimension_semantics = [#tpu.dimension_semantics<arbitrary>], iteration_bounds = array<i64: 1>, scalar_prefetch = 0 : i64, scratch_operands = 1 : i64, tpu.core_type = #tpu.core_type<tc>, window_params = [{transform_indices = @transform_0, window_bounds = array<i64: 8, 768>}, {transform_indices = @transform_1, window_bounds = array<i64: 768, 136>}, {pipeline_mode = #tpu.pipeline_mode<synchronous>, transform_indices = @transform_2, window_bounds = array<i64: 1, 136>}, {pipeline_mode = #tpu.pipeline_mode<synchronous>, transform_indices = @transform_3, window_bounds = array<i64: 8, 136>}, {pipeline_mode = #tpu.pipeline_mode<synchronous>, transform_indices = @transform_4, window_bounds = array<i64: 1, 1>}]} {
    %c0_i32 = arith.constant 0 : i32
    %0 = arith.cmpi eq, %arg0, %c0_i32 : i32
    %1 = arith.extui %0 : i1 to i32
    %c0_i32_0 = arith.constant 0 : i32
    %2 = arith.cmpi ne, %1, %c0_i32_0 : i32
    scf.if %2 {
      %cst_14 = arith.constant 0.000000e+00 : f32
      %21 = vector.broadcast %cst_14 : f32 to vector<8x136xf32>
      %c0_15 = arith.constant 0 : index
      %c0_16 = arith.constant 0 : index
      %22 = vector.load %arg6[%c0_15, %c0_16] : memref<8x136xf32, #tpu.memory_space<vmem>>, vector<8x136xf32>
      tpu.vector_store %arg6[%c0_15, %c0_16], %21 {strides = array<i32>} : memref<8x136xf32, #tpu.memory_space<vmem>>, vector<8x136xf32>,
    } else {
    }
    %c0 = arith.constant 0 : index
    %c0_1 = arith.constant 0 : index
    %3 = vector.load %arg1[%c0, %c0_1] : memref<8x768xf32, #tpu.memory_space<vmem>>, vector<8x768xf32>
    %cst = arith.constant 1.275000e+02 : f32
    %4 = vector.broadcast %cst : f32 to vector<8x768xf32>
    %5 = arith.mulf %3, %4 : vector<8x768xf32>
    %cst_2 = arith.constant 1.275000e+02 : f32
    %6 = vector.broadcast %cst_2 : f32 to vector<8x768xf32>
    %7 = arith.addf %5, %6 : vector<8x768xf32>
    %cst_3 = arith.constant 0.000000e+00 : f32
    %cst_4 = arith.constant 2.550000e+02 : f32
    %8 = vector.broadcast %cst_3 : f32 to vector<8x768xf32>
    %9 = arith.maximumf %8, %7 : vector<8x768xf32>
    %10 = vector.broadcast %cst_4 : f32 to vector<8x768xf32>
    %11 = arith.minimumf %10, %9 : vector<8x768xf32>
    %c0_5 = arith.constant 0 : index
    %c0_6 = arith.constant 0 : index
    %12 = vector.load %arg6[%c0_5, %c0_6] : memref<8x136xf32, #tpu.memory_space<vmem>>, vector<8x136xf32>
    %13 = arith.truncf %11 : vector<8x768xf32> to vector<8x768xbf16>
    %c0_7 = arith.constant 0 : index
    %c0_8 = arith.constant 0 : index
    %14 = vector.load %arg2[%c0_7, %c0_8] : memref<768x136xbf16, #tpu.memory_space<vmem>>, vector<768x136xbf16>
    %cst_9 = arith.constant dense<0.000000e+00> : vector<8x136xf32>
    %15 = tpu.matmul %13, %14, %cst_9 {dimension_numbers = #tpu.dot_dimension_numbers<[1], [0], [0], [1], [0, 0, 1, 1], [], []>} : vector<8x768xbf16>, vector<768x136xbf16>, vector<8x136xf32> -> vector<8x136xf32>
    %16 = arith.addf %12, %15 : vector<8x136xf32>
    %c0_10 = arith.constant 0 : index
    %c0_11 = arith.constant 0 : index
    %17 = vector.load %arg6[%c0_10, %c0_11] : memref<8x136xf32, #tpu.memory_space<vmem>>, vector<8x136xf32>
    tpu.vector_store %arg6[%c0_10, %c0_11], %16 {strides = array<i32>} : memref<8x136xf32, #tpu.memory_space<vmem>>, vector<8x136xf32>,
    %c0_i32_12 = arith.constant 0 : i32
    %18 = arith.cmpi eq, %arg0, %c0_i32_12 : i32
    %19 = arith.extui %18 : i1 to i32
    %c0_i32_13 = arith.constant 0 : i32
    %20 = arith.cmpi ne, %19, %c0_i32_13 : i32
    scf.if %20 {
      %c0_14 = arith.constant 0 : index
      %c0_15 = arith.constant 0 : index
      %21 = vector.load %arg6[%c0_14, %c0_15] : memref<8x136xf32, #tpu.memory_space<vmem>>, vector<8x136xf32>
      %c0_16 = arith.constant 0 : index
      %c0_17 = arith.constant 0 : index
      %22 = vector.load %arg3[%c0_16, %c0_17] : memref<1x136xf32, #tpu.memory_space<vmem>>, vector<1x136xf32>
      %23 = vector.broadcast %22 : vector<1x136xf32> to vector<8x136xf32>
      %24 = arith.addf %21, %23 : vector<8x136xf32>
      %c0_18 = arith.constant 0 : index
      %c0_19 = arith.constant 0 : index
      %25 = vector.load %arg4[%c0_18, %c0_19] : memref<8x136xf32, #tpu.memory_space<vmem>>, vector<8x136xf32>
      %26 = arith.subf %24, %25 : vector<8x136xf32>
      %27 = tpu.iota {dimensions = array<i32: 0>} : vector<8x136xi32>
      %c2_i32 = arith.constant 2 : i32
      %28 = vector.broadcast %c2_i32 : i32 to vector<8x136xi32>
      %29 = arith.cmpi slt, %27, %28 : vector<8x136xi32>
      %30 = arith.mulf %26, %26 : vector<8x136xf32>
      %cst_20 = arith.constant 0.000000e+00 : f32
      %31 = vector.broadcast %cst_20 : f32 to vector<8x136xf32>
      %32 = arith.select %29, %30, %31 : vector<8x136xi1>, vector<8x136xf32>
      %33 = vector.shape_cast %32 : vector<8x136xf32> to vector<1x8x136xf32>
      %cst_21 = arith.constant dense<0.000000e+00> : vector<1xf32>
      %34 = vector.multi_reduction <add>, %33, %cst_21 [1, 2] : vector<1x8x136xf32> to vector<1xf32>
      %35 = vector.shape_cast %34 : vector<1xf32> to vector<1x1x1xf32>
      %36 = vector.extract %35[0, 0, 0] : f32 from vector<1x1x1xf32>
      %cst_22 = arith.constant 0.0036764706 : f32
      %37 = arith.mulf %36, %cst_22 : f32
      %38 = vector.broadcast %37 : f32 to vector<1x1xf32>
      %c0_23 = arith.constant 0 : index
      %c0_24 = arith.constant 0 : index
      %39 = vector.load %arg5[%c0_23, %c0_24] : memref<1x1xf32, #tpu.memory_space<vmem>>, vector<1x1xf32>
      tpu.vector_store %arg5[%c0_23, %c0_24], %38 {strides = array<i32>} : memref<1x1xf32, #tpu.memory_space<vmem>>, vector<1x1xf32>,
    } else {
    }
    return
  }
  func.func @transform_0(%arg0: i32) -> (i32, i32) {
    %c0_i32 = arith.constant 0 : i32
    %c0_i32_0 = arith.constant 0 : i32
    return %c0_i32, %arg0 : i32, i32
  }
  func.func @transform_1(%arg0: i32) -> (i32, i32) {
    %c0_i32 = arith.constant 0 : i32
    %c0_i32_0 = arith.constant 0 : i32
    return %arg0, %c0_i32 : i32, i32
  }
  func.func @transform_2(%arg0: i32) -> (i32, i32) {
    %c0_i32 = arith.constant 0 : i32
    %c0_i32_0 = arith.constant 0 : i32
    %c0_i32_1 = arith.constant 0 : i32
    return %c0_i32, %c0_i32_0 : i32, i32
  }
  func.func @transform_3(%arg0: i32) -> (i32, i32) {
    %c0_i32 = arith.constant 0 : i32
    %c0_i32_0 = arith.constant 0 : i32
    %c0_i32_1 = arith.constant 0 : i32
    return %c0_i32, %c0_i32_0 : i32, i32
  }
  func.func @transform_4(%arg0: i32) -> (i32, i32) {
    %c0_i32 = arith.constant 0 : i32
    %c0_i32_0 = arith.constant 0 : i32
    %c0_i32_1 = arith.constant 0 : i32
    return %c0_i32, %c0_i32_0 : i32, i32
  }
}

</mosaic_0001>

<llo_original>
// kernel: _lambda_.1
$region0: #{_lambda_.1}
  #allocation0 [shape = 'u32[]', space=smem, size = 0x4, offset = 0x4, fixed_abs, tag = 'smem constant byte address 0x4 - core index']
  #allocation1 [shape = 'u32[144,128]{1,0:T(1,128)}', space=vmem, size = 0x12000, scoped, tag = 'internal scratch']
  #allocation2 [shape = 'f32[8,136]{1,0:T(8,128)}', space=vmem, size = 0x2000, scoped, tag = 'scratch operand']
  %s0 = inlined_call_operand.vmem [shape: f32[8,768], index: 0, kind: input, shape index: {}]
  %s1 = inlined_call_operand.vmem [shape: bf16[768,136], index: 1, kind: input, shape index: {}]
  %s2 = inlined_call_operand.vmem [shape: f32[1,136], index: 2, kind: input, shape index: {}]
  %s3 = inlined_call_operand.vmem [shape: f32[8,136], index: 3, kind: input, shape index: {}]
  %s4 = inlined_call_operand.hbm [shape: f32[1,1], index: 4, kind: output, shape index: {}]
  %s5 = sld [smem:[#allocation0]]
  $region34: #{_lambda_.1} parent=0
    _
  %s7 = ssub.s32 1, %s5
  %s8 = scalar_select 0, %s7, %s5
  $region1: #{_lambda_.1} parent=0
    #allocation3 [shape = 'u8[512]{0}', space=vmem, size = 0x400, scoped, tag = 'output window, operand 0, single buffered']
    #allocation4 [shape = 's32[1]{0}', space=sflag, size = 0x4, scoped, tag = 'scoped memory for _lambda_.1']
    %9 = vsyncpa [#allocation4], 0
    // Predicated region
    $region2: #{_lambda_.1} parent=1 // pred_check
      _
    $region3: #{_lambda_.1} parent=1 // pred_check_branch
      %11 = sbr.rel (0) target = $region5
    $region4: #{_lambda_.1} parent=1 // pred_region
      _
    $region5: #{_lambda_.1} parent=1 // pred_fallthru
      _
    // Predicated region
    $region6: #{_lambda_.1} parent=1 // pred_check
      _
    $region7: #{_lambda_.1} parent=1 // pred_check_branch
      %13 = sbr.rel (0) target = $region9
    $region8: #{_lambda_.1} parent=1 // pred_region
      _
    $region9: #{_lambda_.1} parent=1 // pred_fallthru
      _
    // Predicated region
    $region10: #{_lambda_.1} parent=1 // pred_check
      _
    $region11: #{_lambda_.1} parent=1 // pred_check_branch
      %15 = sbr.rel (0) target = $region13
    $region12: #{_lambda_.1} parent=1 // pred_region
      _
    $region13: #{_lambda_.1} parent=1 // pred_fallthru
      _
    // Predicated region
    $region14: #{_lambda_.1} parent=1 // pred_check
      _
    $region15: #{_lambda_.1} parent=1 // pred_check_branch
      %17 = sbr.rel (0) target = $region17
    $region16: #{_lambda_.1} parent=1 // pred_region
      _
    $region17: #{_lambda_.1} parent=1 // pred_fallthru
      _
    %p18 = scmp.eq.s32.totalorder 0, 0
    // Predicated region
    $region18: #{_lambda_.1} parent=1 // pred_check
      %p19 = pneg %p18
    $region19: #{_lambda_.1} parent=1 // pred_check_branch
      %21 = sbr.rel (%p19) target = $region21
    $region20: #{_lambda_.1} parent=1 // pred_region
      %22 = vst [vmem:[#allocation2] sm:$0xff] 0.0
      %vm23 = vcmask 64512
      %24 = vst.msk [vmem:[#allocation2 + $0x8] sm:$0xff] %vm23, 0.0
    $region21: #{_lambda_.1} parent=1 // pred_fallthru
      _
    %v25 = vld [vmem:[%s0] sm:$0xff]
    %v26 = vld [vmem:[%s0 + $0x8] sm:$0xff]
    %v27 = vld [vmem:[%s0 + $0x10] sm:$0xff]
    %v28 = vld [vmem:[%s0 + $0x18] sm:$0xff]
    %v29 = vld [vmem:[%s0 + $0x20] sm:$0xff]
    %v30 = vld [vmem:[%s0 + $0x28] sm:$0xff]
    %v31 = vmul.f32 %v25, 127.5
    %v32 = vmul.f32 %v26, 127.5
    %v33 = vmul.f32 %v27, 127.5
    %v34 = vmul.f32 %v28, 127.5
    %v35 = vmul.f32 %v29, 127.5
    %v36 = vmul.f32 %v30, 127.5
    %v37 = vadd.f32 %v31, 127.5
    %v38 = vadd.f32 %v32, 127.5
    %v39 = vadd.f32 %v33, 127.5
    %v40 = vadd.f32 %v34, 127.5
    %v41 = vadd.f32 %v35, 127.5
    %v42 = vadd.f32 %v36, 127.5
    %v43 = vmax.f32 %v37, 0.0
    %v44 = vmax.f32 %v38, 0.0
    %v45 = vmax.f32 %v39, 0.0
    %v46 = vmax.f32 %v40, 0.0
    %v47 = vmax.f32 %v41, 0.0
    %v48 = vmax.f32 %v42, 0.0
    %v49 = vmin.f32 %v43, 255.0
    %v50 = vmin.f32 %v44, 255.0
    %v51 = vmin.f32 %v45, 255.0
    %v52 = vmin.f32 %v46, 255.0
    %v53 = vmin.f32 %v47, 255.0
    %v54 = vmin.f32 %v48, 255.0
    %v55 = vld [vmem:[#allocation2] sm:$0xff]
    %v56 = vld [vmem:[#allocation2 + $0x8] sm:$0xff]
    %v57 = vpack.c.bf16 %v49, %v49
    %v58 = vpack.c.bf16 %v50, %v50
    %v59 = vpack.c.bf16 %v51, %v51
    %v60 = vpack.c.bf16 %v52, %v52
    %v61 = vpack.c.bf16 %v53, %v53
    %v62 = vpack.c.bf16 %v54, %v54
    %v63 = vld [vmem:[%s1] sm:$0xff]
    %v64 = vld [vmem:[%s1 + $0x8] sm:$0xff]
    %v65 = vld [vmem:[%s1 + $0x10] sm:$0xff]
    %v66 = vld [vmem:[%s1 + $0x18] sm:$0xff]
    %v67 = vld [vmem:[%s1 + $0x20] sm:$0xff]
    %v68 = vld [vmem:[%s1 + $0x28] sm:$0xff]
    %v69 = vld [vmem:[%s1 + $0x30] sm:$0xff]
    %v70 = vld [vmem:[%s1 + $0x38] sm:$0xff]
    %v71 = vld [vmem:[%s1 + $0x40] sm:$0xff]
    %v72 = vld [vmem:[%s1 + $0x48] sm:$0xff]
    %v73 = vld [vmem:[%s1 + $0x50] sm:$0xff]
    %v74 = vld [vmem:[%s1 + $0x58] sm:$0xff]
    %v75 = vld [vmem:[%s1 + $0x60] sm:$0xff]
    %v76 = vld [vmem:[%s1 + $0x68] sm:$0xff]
    %v77 = vld [vmem:[%s1 + $0x70] sm:$0xff]
    %v78 = vld [vmem:[%s1 + $0x78] sm:$0xff]
    %v79 = vld [vmem:[%s1 + $0x80] sm:$0xff]
    %v80 = vld [vmem:[%s1 + $0x88] sm:$0xff]
    %v81 = vld [vmem:[%s1 + $0x90] sm:$0xff]
    %v82 = vld [vmem:[%s1 + $0x98] sm:$0xff]
    %v83 = vld [vmem:[%s1 + $0xa0] sm:$0xff]
    %v84 = vld [vmem:[%s1 + $0xa8] sm:$0xff]
    %v85 = vld [vmem:[%s1 + $0xb0] sm:$0xff]
    %v86 = vld [vmem:[%s1 + $0xb8] sm:$0xff]
    %v87 = vld [vmem:[%s1 + $0xc0] sm:$0xff]
    %v88 = vld [vmem:[%s1 + $0xc8] sm:$0xff]
    %v89 = vld [vmem:[%s1 + $0xd0] sm:$0xff]
    %v90 = vld [vmem:[%s1 + $0xd8] sm:$0xff]
    %v91 = vld [vmem:[%s1 + $0xe0] sm:$0xff]
    %v92 = vld [vmem:[%s1 + $0xe8] sm:$0xff]
    %v93 = vld [vmem:[%s1 + $0xf0] sm:$0xff]
    %v94 = vld [vmem:[%s1 + $0xf8] sm:$0xff]
    %v95 = vld [vmem:[%s1 + $0x100] sm:$0xff]
    %v96 = vld [vmem:[%s1 + $0x108] sm:$0xff]
    %v97 = vld [vmem:[%s1 + $0x110] sm:$0xff]
    %v98 = vld [vmem:[%s1 + $0x118] sm:$0xff]
    %v99 = vld [vmem:[%s1 + $0x120] sm:$0xff]
    %v100 = vld [vmem:[%s1 + $0x128] sm:$0xff]
    %v101 = vld [vmem:[%s1 + $0x130] sm:$0xff]
    %v102 = vld [vmem:[%s1 + $0x138] sm:$0xff]
    %v103 = vld [vmem:[%s1 + $0x140] sm:$0xff]
    %v104 = vld [vmem:[%s1 + $0x148] sm:$0xff]
    %v105 = vld [vmem:[%s1 + $0x150] sm:$0xff]
    %v106 = vld [vmem:[%s1 + $0x158] sm:$0xff]
    %v107 = vld [vmem:[%s1 + $0x160] sm:$0xff]
    %v108 = vld [vmem:[%s1 + $0x168] sm:$0xff]
    %v109 = vld [vmem:[%s1 + $0x170] sm:$0xff]
    %v110 = vld [vmem:[%s1 + $0x178] sm:$0xff]
    %v111 = vld [vmem:[%s1 + $0x180] sm:$0xff]
    %v112 = vld [vmem:[%s1 + $0x188] sm:$0xff]
    %v113 = vld [vmem:[%s1 + $0x190] sm:$0xff]
    %v114 = vld [vmem:[%s1 + $0x198] sm:$0xff]
    %v115 = vld [vmem:[%s1 + $0x1a0] sm:$0xff]
    %v116 = vld [vmem:[%s1 + $0x1a8] sm:$0xff]
    %v117 = vld [vmem:[%s1 + $0x1b0] sm:$0xff]
    %v118 = vld [vmem:[%s1 + $0x1b8] sm:$0xff]
    %v119 = vld [vmem:[%s1 + $0x1c0] sm:$0xff]
    %v120 = vld [vmem:[%s1 + $0x1c8] sm:$0xff]
    %v121 = vld [vmem:[%s1 + $0x1d0] sm:$0xff]
    %v122 = vld [vmem:[%s1 + $0x1d8] sm:$0xff]
    %v123 = vld [vmem:[%s1 + $0x1e0] sm:$0xff]
    %v124 = vld [vmem:[%s1 + $0x1e8] sm:$0xff]
    %v125 = vld [vmem:[%s1 + $0x1f0] sm:$0xff]
    %v126 = vld [vmem:[%s1 + $0x1f8] sm:$0xff]
    %v127 = vld [vmem:[%s1 + $0x200] sm:$0xff]
    %v128 = vld [vmem:[%s1 + $0x208] sm:$0xff]
    %v129 = vld [vmem:[%s1 + $0x210] sm:$0xff]
    %v130 = vld [vmem:[%s1 + $0x218] sm:$0xff]
    %v131 = vld [vmem:[%s1 + $0x220] sm:$0xff]
    %v132 = vld [vmem:[%s1 + $0x228] sm:$0xff]
    %v133 = vld [vmem:[%s1 + $0x230] sm:$0xff]
    %v134 = vld [vmem:[%s1 + $0x238] sm:$0xff]
    %v135 = vld [vmem:[%s1 + $0x240] sm:$0xff]
    %v136 = vld [vmem:[%s1 + $0x248] sm:$0xff]
    %v137 = vld [vmem:[%s1 + $0x250] sm:$0xff]
    %v138 = vld [vmem:[%s1 + $0x258] sm:$0xff]
    %v139 = vld [vmem:[%s1 + $0x260] sm:$0xff]
    %v140 = vld [vmem:[%s1 + $0x268] sm:$0xff]
    %v141 = vld [vmem:[%s1 + $0x270] sm:$0xff]
    %v142 = vld [vmem:[%s1 + $0x278] sm:$0xff]
    %v143 = vld [vmem:[%s1 + $0x280] sm:$0xff]
    %v144 = vld [vmem:[%s1 + $0x288] sm:$0xff]
    %v145 = vld [vmem:[%s1 + $0x290] sm:$0xff]
    %v146 = vld [vmem:[%s1 + $0x298] sm:$0xff]
    %v147 = vld [vmem:[%s1 + $0x2a0] sm:$0xff]
    %v148 = vld [vmem:[%s1 + $0x2a8] sm:$0xff]
    %v149 = vld [vmem:[%s1 + $0x2b0] sm:$0xff]
    %v150 = vld [vmem:[%s1 + $0x2b8] sm:$0xff]
    %v151 = vld [vmem:[%s1 + $0x2c0] sm:$0xff]
    %v152 = vld [vmem:[%s1 + $0x2c8] sm:$0xff]
    %v153 = vld [vmem:[%s1 + $0x2d0] sm:$0xff]
    %v154 = vld [vmem:[%s1 + $0x2d8] sm:$0xff]
    %v155 = vld [vmem:[%s1 + $0x2e0] sm:$0xff]
    %v156 = vld [vmem:[%s1 + $0x2e8] sm:$0xff]
    %v157 = vld [vmem:[%s1 + $0x2f0] sm:$0xff]
    %v158 = vld [vmem:[%s1 + $0x2f8] sm:$0xff]
    %v255 = vunpack.c.l.b16 %v63
    %v256 = vunpack.c.h.b16 %v63
    %v257 = vunpack.c.l.b16 %v64
    %v258 = vunpack.c.h.b16 %v64
    %v259 = vunpack.c.l.b16 %v65
    %v260 = vunpack.c.h.b16 %v65
    %v261 = vunpack.c.l.b16 %v66
    %v262 = vunpack.c.h.b16 %v66
    %v263 = vunpack.c.l.b16 %v67
    %v264 = vunpack.c.h.b16 %v67
    %v265 = vunpack.c.l.b16 %v68
    %v266 = vunpack.c.h.b16 %v68
    %v267 = vunpack.c.l.b16 %v69
    %v268 = vunpack.c.h.b16 %v69
    %v269 = vunpack.c.l.b16 %v70
    %v270 = vunpack.c.h.b16 %v70
    %v271 = vunpack.c.l.b16 %v71
    %v272 = vunpack.c.h.b16 %v71
    %v273 = vunpack.c.l.b16 %v72
    %v274 = vunpack.c.h.b16 %v72
    %v275 = vunpack.c.l.b16 %v73
    %v276 = vunpack.c.h.b16 %v73
    %v277 = vunpack.c.l.b16 %v74
    %v278 = vunpack.c.h.b16 %v74
    %v279 = vunpack.c.l.b16 %v75
    %v280 = vunpack.c.h.b16 %v75
    %v281 = vunpack.c.l.b16 %v76
    %v282 = vunpack.c.h.b16 %v76
    %v283 = vunpack.c.l.b16 %v77
    %v284 = vunpack.c.h.b16 %v77
    %v285 = vunpack.c.l.b16 %v78
    %v286 = vunpack.c.h.b16 %v78
    %v287 = vunpack.c.l.b16 %v79
    %v288 = vunpack.c.h.b16 %v79
    %v289 = vunpack.c.l.b16 %v80
    %v290 = vunpack.c.h.b16 %v80
    %v291 = vunpack.c.l.b16 %v81
    %v292 = vunpack.c.h.b16 %v81
    %v293 = vunpack.c.l.b16 %v82
    %v294 = vunpack.c.h.b16 %v82
    %v295 = vunpack.c.l.b16 %v83
    %v296 = vunpack.c.h.b16 %v83
    %v297 = vunpack.c.l.b16 %v84
    %v298 = vunpack.c.h.b16 %v84
    %v299 = vunpack.c.l.b16 %v85
    %v300 = vunpack.c.h.b16 %v85
    %v301 = vunpack.c.l.b16 %v86
    %v302 = vunpack.c.h.b16 %v86
    %v303 = vunpack.c.l.b16 %v87
    %v304 = vunpack.c.h.b16 %v87
    %v305 = vunpack.c.l.b16 %v88
    %v306 = vunpack.c.h.b16 %v88
    %v307 = vunpack.c.l.b16 %v89
    %v308 = vunpack.c.h.b16 %v89
    %v309 = vunpack.c.l.b16 %v90
    %v310 = vunpack.c.h.b16 %v90
    %v311 = vunpack.c.l.b16 %v91
    %v312 = vunpack.c.h.b16 %v91
    %v313 = vunpack.c.l.b16 %v92
    %v314 = vunpack.c.h.b16 %v92
    %v315 = vunpack.c.l.b16 %v93
    %v316 = vunpack.c.h.b16 %v93
    %v317 = vunpack.c.l.b16 %v94
    %v318 = vunpack.c.h.b16 %v94
    %v319 = vunpack.c.l.b16 %v95
    %v320 = vunpack.c.h.b16 %v95
    %v321 = vunpack.c.l.b16 %v96
    %v322 = vunpack.c.h.b16 %v96
    %v323 = vunpack.c.l.b16 %v97
    %v324 = vunpack.c.h.b16 %v97
    %v325 = vunpack.c.l.b16 %v98
    %v326 = vunpack.c.h.b16 %v98
    %v327 = vunpack.c.l.b16 %v99
    %v328 = vunpack.c.h.b16 %v99
    %v329 = vunpack.c.l.b16 %v100
    %v330 = vunpack.c.h.b16 %v100
    %v331 = vunpack.c.l.b16 %v101
    %v332 = vunpack.c.h.b16 %v101
    %v333 = vunpack.c.l.b16 %v102
    %v334 = vunpack.c.h.b16 %v102
    %v335 = vunpack.c.l.b16 %v103
    %v336 = vunpack.c.h.b16 %v103
    %v337 = vunpack.c.l.b16 %v104
    %v338 = vunpack.c.h.b16 %v104
    %v339 = vunpack.c.l.b16 %v105
    %v340 = vunpack.c.h.b16 %v105
    %v341 = vunpack.c.l.b16 %v106
    %v342 = vunpack.c.h.b16 %v106
    %v343 = vunpack.c.l.b16 %v107
    %v344 = vunpack.c.h.b16 %v107
    %v345 = vunpack.c.l.b16 %v108
    %v346 = vunpack.c.h.b16 %v108
    %v347 = vunpack.c.l.b16 %v109
    %v348 = vunpack.c.h.b16 %v109
    %v349 = vunpack.c.l.b16 %v110
    %v350 = vunpack.c.h.b16 %v110
    %v351 = vunpack.c.l.b16 %v111
    %v352 = vunpack.c.h.b16 %v111
    %v353 = vunpack.c.l.b16 %v112
    %v354 = vunpack.c.h.b16 %v112
    %v355 = vunpack.c.l.b16 %v113
    %v356 = vunpack.c.h.b16 %v113
    %v357 = vunpack.c.l.b16 %v114
    %v358 = vunpack.c.h.b16 %v114
    %v359 = vunpack.c.l.b16 %v115
    %v360 = vunpack.c.h.b16 %v115
    %v361 = vunpack.c.l.b16 %v116
    %v362 = vunpack.c.h.b16 %v116
    %v363 = vunpack.c.l.b16 %v117
    %v364 = vunpack.c.h.b16 %v117
    %v365 = vunpack.c.l.b16 %v118
    %v366 = vunpack.c.h.b16 %v118
    %v367 = vunpack.c.l.b16 %v119
    %v368 = vunpack.c.h.b16 %v119
    %v369 = vunpack.c.l.b16 %v120
    %v370 = vunpack.c.h.b16 %v120
    %v371 = vunpack.c.l.b16 %v121
    %v372 = vunpack.c.h.b16 %v121
    %v373 = vunpack.c.l.b16 %v122
    %v374 = vunpack.c.h.b16 %v122
    %v375 = vunpack.c.l.b16 %v123
    %v376 = vunpack.c.h.b16 %v123
    %v377 = vunpack.c.l.b16 %v124
    %v378 = vunpack.c.h.b16 %v124
    %v379 = vunpack.c.l.b16 %v125
    %v380 = vunpack.c.h.b16 %v125
    %v381 = vunpack.c.l.b16 %v126
    %v382 = vunpack.c.h.b16 %v126
    %v383 = vunpack.c.l.b16 %v127
    %v384 = vunpack.c.h.b16 %v127
    %v385 = vunpack.c.l.b16 %v128
    %v386 = vunpack.c.h.b16 %v128
    %v387 = vunpack.c.l.b16 %v129
    %v388 = vunpack.c.h.b16 %v129
    %v389 = vunpack.c.l.b16 %v130
    %v390 = vunpack.c.h.b16 %v130
    %v391 = vunpack.c.l.b16 %v131
    %v392 = vunpack.c.h.b16 %v131
    %v393 = vunpack.c.l.b16 %v132
    %v394 = vunpack.c.h.b16 %v132
    %v395 = vunpack.c.l.b16 %v133
    %v396 = vunpack.c.h.b16 %v133
    %v397 = vunpack.c.l.b16 %v134
    %v398 = vunpack.c.h.b16 %v134
    %v399 = vunpack.c.l.b16 %v135
    %v400 = vunpack.c.h.b16 %v135
    %v401 = vunpack.c.l.b16 %v136
    %v402 = vunpack.c.h.b16 %v136
    %v403 = vunpack.c.l.b16 %v137
    %v404 = vunpack.c.h.b16 %v137
    %v405 = vunpack.c.l.b16 %v138
    %v406 = vunpack.c.h.b16 %v138
    %v407 = vunpack.c.l.b16 %v139
    %v408 = vunpack.c.h.b16 %v139
    %v409 = vunpack.c.l.b16 %v140
    %v410 = vunpack.c.h.b16 %v140
    %v411 = vunpack.c.l.b16 %v141
    %v412 = vunpack.c.h.b16 %v141
    %v413 = vunpack.c.l.b16 %v142
    %v414 = vunpack.c.h.b16 %v142
    %v415 = vunpack.c.l.b16 %v143
    %v416 = vunpack.c.h.b16 %v143
    %v417 = vunpack.c.l.b16 %v144
    %v418 = vunpack.c.h.b16 %v144
    %v419 = vunpack.c.l.b16 %v145
    %v420 = vunpack.c.h.b16 %v145
    %v421 = vunpack.c.l.b16 %v146
    %v422 = vunpack.c.h.b16 %v146
    %v423 = vunpack.c.l.b16 %v147
    %v424 = vunpack.c.h.b16 %v147
    %v425 = vunpack.c.l.b16 %v148
    %v426 = vunpack.c.h.b16 %v148
    %v427 = vunpack.c.l.b16 %v149
    %v428 = vunpack.c.h.b16 %v149
    %v429 = vunpack.c.l.b16 %v150
    %v430 = vunpack.c.h.b16 %v150
    %v431 = vunpack.c.l.b16 %v151
    %v432 = vunpack.c.h.b16 %v151
    %v433 = vunpack.c.l.b16 %v152
    %v434 = vunpack.c.h.b16 %v152
    %v435 = vunpack.c.l.b16 %v153
    %v436 = vunpack.c.h.b16 %v153
    %v437 = vunpack.c.l.b16 %v154
    %v438 = vunpack.c.h.b16 %v154
    %v439 = vunpack.c.l.b16 %v155
    %v440 = vunpack.c.h.b16 %v155
    %v441 = vunpack.c.l.b16 %v156
    %v442 = vunpack.c.h.b16 %v156
    %v443 = vunpack.c.l.b16 %v157
    %v444 = vunpack.c.h.b16 %v157
    %v445 = vunpack.c.l.b16 %v158
    %v446 = vunpack.c.h.b16 %v158
    %v447 = vpack.c.b16 %v257, %v255
    %v448 = vpack.c.b16 %v258, %v256
    %v449 = vpack.c.b16 %v261, %v259
    %v450 = vpack.c.b16 %v262, %v260
    %v451 = vpack.c.b16 %v265, %v263
    %v452 = vpack.c.b16 %v266, %v264
    %v453 = vpack.c.b16 %v269, %v267
    %v454 = vpack.c.b16 %v270, %v268
    %v455 = vpack.c.b16 %v273, %v271
    %v456 = vpack.c.b16 %v274, %v272
    %v457 = vpack.c.b16 %v277, %v275
    %v458 = vpack.c.b16 %v278, %v276
    %v459 = vpack.c.b16 %v281, %v279
    %v460 = vpack.c.b16 %v282, %v280
    %v461 = vpack.c.b16 %v285, %v283
    %v462 = vpack.c.b16 %v286, %v284
    %v463 = vpack.c.b16 %v289, %v287
    %v464 = vpack.c.b16 %v290, %v288
    %v465 = vpack.c.b16 %v293, %v291
    %v466 = vpack.c.b16 %v294, %v292
    %v467 = vpack.c.b16 %v297, %v295
    %v468 = vpack.c.b16 %v298, %v296
    %v469 = vpack.c.b16 %v301, %v299
    %v470 = vpack.c.b16 %v302, %v300
    %v471 = vpack.c.b16 %v305, %v303
    %v472 = vpack.c.b16 %v306, %v304
    %v473 = vpack.c.b16 %v309, %v307
    %v474 = vpack.c.b16 %v310, %v308
    %v475 = vpack.c.b16 %v313, %v311
    %v476 = vpack.c.b16 %v314, %v312
    %v477 = vpack.c.b16 %v317, %v315
    %v478 = vpack.c.b16 %v318, %v316
    %v479 = vpack.c.b16 %v321, %v319
    %v480 = vpack.c.b16 %v322, %v320
    %v481 = vpack.c.b16 %v325, %v323
    %v482 = vpack.c.b16 %v326, %v324
    %v483 = vpack.c.b16 %v329, %v327
    %v484 = vpack.c.b16 %v330, %v328
    %v485 = vpack.c.b16 %v333, %v331
    %v486 = vpack.c.b16 %v334, %v332
    %v487 = vpack.c.b16 %v337, %v335
    %v488 = vpack.c.b16 %v338, %v336
    %v489 = vpack.c.b16 %v341, %v339
    %v490 = vpack.c.b16 %v342, %v340
    %v491 = vpack.c.b16 %v345, %v343
    %v492 = vpack.c.b16 %v346, %v344
    %v493 = vpack.c.b16 %v349, %v347
    %v494 = vpack.c.b16 %v350, %v348
    %v495 = vpack.c.b16 %v353, %v351
    %v496 = vpack.c.b16 %v354, %v352
    %v497 = vpack.c.b16 %v357, %v355
    %v498 = vpack.c.b16 %v358, %v356
    %v499 = vpack.c.b16 %v361, %v359
    %v500 = vpack.c.b16 %v362, %v360
    %v501 = vpack.c.b16 %v365, %v363
    %v502 = vpack.c.b16 %v366, %v364
    %v503 = vpack.c.b16 %v369, %v367
    %v504 = vpack.c.b16 %v370, %v368
    %v505 = vpack.c.b16 %v373, %v371
    %v506 = vpack.c.b16 %v374, %v372
    %v507 = vpack.c.b16 %v377, %v375
    %v508 = vpack.c.b16 %v378, %v376
    %v509 = vpack.c.b16 %v381, %v379
    %v510 = vpack.c.b16 %v382, %v380
    %v511 = vpack.c.b16 %v385, %v383
    %v512 = vpack.c.b16 %v386, %v384
    %v513 = vpack.c.b16 %v389, %v387
    %v514 = vpack.c.b16 %v390, %v388
    %v515 = vpack.c.b16 %v393, %v391
    %v516 = vpack.c.b16 %v394, %v392
    %v517 = vpack.c.b16 %v397, %v395
    %v518 = vpack.c.b16 %v398, %v396
    %v519 = vpack.c.b16 %v401, %v399
    %v520 = vpack.c.b16 %v402, %v400
    %v521 = vpack.c.b16 %v405, %v403
    %v522 = vpack.c.b16 %v406, %v404
    %v523 = vpack.c.b16 %v409, %v407
    %v524 = vpack.c.b16 %v410, %v408
    %v525 = vpack.c.b16 %v413, %v411
    %v526 = vpack.c.b16 %v414, %v412
    %v527 = vpack.c.b16 %v417, %v415
    %v528 = vpack.c.b16 %v418, %v416
    %v529 = vpack.c.b16 %v421, %v419
    %v530 = vpack.c.b16 %v422, %v420
    %v531 = vpack.c.b16 %v425, %v423
    %v532 = vpack.c.b16 %v426, %v424
    %v533 = vpack.c.b16 %v429, %v427
    %v534 = vpack.c.b16 %v430, %v428
    %v535 = vpack.c.b16 %v433, %v431
    %v536 = vpack.c.b16 %v434, %v432
    %v537 = vpack.c.b16 %v437, %v435
    %v538 = vpack.c.b16 %v438, %v436
    %v539 = vpack.c.b16 %v441, %v439
    %v540 = vpack.c.b16 %v442, %v440
    %v541 = vpack.c.b16 %v445, %v443
    %v542 = vpack.c.b16 %v446, %v444
    %639 = vmatprep.subr.bf16.mxu0 %v448
    %640 = vmatpush1.bf16.msra.mxu0 %v447
    %641 = vmatprep.subr.bf16.mxu0 %v450
    %642 = vmatpush1.bf16.msra.mxu0 %v449
    %643 = vmatprep.subr.bf16.mxu0 %v452
    %644 = vmatpush1.bf16.msra.mxu0 %v451
    %645 = vmatprep.subr.bf16.mxu0 %v454
    %646 = vmatpush1.bf16.msra.mxu0 %v453
    %647 = vmatprep.subr.bf16.mxu0 %v456
    %648 = vmatpush1.bf16.msra.mxu0 %v455
    %649 = vmatprep.subr.bf16.mxu0 %v458
    %650 = vmatpush1.bf16.msra.mxu0 %v457
    %651 = vmatprep.subr.bf16.mxu0 %v460
    %652 = vmatpush1.bf16.msra.mxu0 %v459
    %653 = vmatprep.subr.bf16.mxu0 %v462
    %654 = vmatpush1.bf16.msra.mxu0 %v461
    %655 = vmatprep.subr.bf16.mxu0 %v464
    %656 = vmatpush1.bf16.msra.mxu0 %v463
    %657 = vmatprep.subr.bf16.mxu0 %v466
    %658 = vmatpush1.bf16.msra.mxu0 %v465
    %659 = vmatprep.subr.bf16.mxu0 %v468
    %660 = vmatpush1.bf16.msra.mxu0 %v467
    %661 = vmatprep.subr.bf16.mxu0 %v470
    %662 = vmatpush1.bf16.msra.mxu0 %v469
    %663 = vmatprep.subr.bf16.mxu0 %v472
    %664 = vmatpush1.bf16.msra.mxu0 %v471
    %665 = vmatprep.subr.bf16.mxu0 %v474
    %666 = vmatpush1.bf16.msra.mxu0 %v473
    %667 = vmatprep.subr.bf16.mxu0 %v476
    %668 = vmatpush1.bf16.msra.mxu0 %v475
    %669 = vmatprep.subr.bf16.mxu0 %v478
    %670 = vmatpush1.bf16.msra.mxu0 %v477
    %671 = vmatprep.mubr.bf16.mxu0 %v58
    %672 = vmatmul.mubr.bf16.gmra.mrb[0].mxu0 %v57
    %v673 = vpop.f32.mrb[0].mxu0
    %v674 = vadd.f32 0.0, %v673
    %v675 = vpop.f32.mrb[0].mxu0
    %v676 = vadd.f32 0.0, %v675
    %v677 = vpop.f32.mrb[0].mxu0
    %v678 = vpop.f32.mrb[0].mxu0
    %679 = vdwg.mxu0
    %680 = vmatprep.subr.bf16.mxu0 %v480
    %681 = vmatpush1.bf16.msra.mxu0 %v479
    %682 = vmatprep.subr.bf16.mxu0 %v482
    %683 = vmatpush1.bf16.msra.mxu0 %v481
    %684 = vmatprep.subr.bf16.mxu0 %v484
    %685 = vmatpush1.bf16.msra.mxu0 %v483
    %686 = vmatprep.subr.bf16.mxu0 %v486
    %687 = vmatpush1.bf16.msra.mxu0 %v485
    %688 = vmatprep.subr.bf16.mxu0 %v488
    %689 = vmatpush1.bf16.msra.mxu0 %v487
    %690 = vmatprep.subr.bf16.mxu0 %v490
    %691 = vmatpush1.bf16.msra.mxu0 %v489
    %692 = vmatprep.subr.bf16.mxu0 %v492
    %693 = vmatpush1.bf16.msra.mxu0 %v491
    %694 = vmatprep.subr.bf16.mxu0 %v494
    %695 = vmatpush1.bf16.msra.mxu0 %v493
    %696 = vmatprep.subr.bf16.mxu0 %v496
    %697 = vmatpush1.bf16.msra.mxu0 %v495
    %698 = vmatprep.subr.bf16.mxu0 %v498
    %699 = vmatpush1.bf16.msra.mxu0 %v497
    %700 = vmatprep.subr.bf16.mxu0 %v500
    %701 = vmatpush1.bf16.msra.mxu0 %v499
    %702 = vmatprep.subr.bf16.mxu0 %v502
    %703 = vmatpush1.bf16.msra.mxu0 %v501
    %704 = vmatprep.subr.bf16.mxu0 %v504
    %705 = vmatpush1.bf16.msra.mxu0 %v503
    %706 = vmatprep.subr.bf16.mxu0 %v506
    %707 = vmatpush1.bf16.msra.mxu0 %v505
    %708 = vmatprep.subr.bf16.mxu0 %v508
    %709 = vmatpush1.bf16.msra.mxu0 %v507
    %710 = vmatprep.subr.bf16.mxu0 %v510
    %711 = vmatpush1.bf16.msra.mxu0 %v509
    %712 = vmatprep.mubr.bf16.mxu0 %v60
    %713 = vmatmul.mubr.bf16.gmra.mrb[0].mxu0 %v59
    %v714 = vpop.f32.mrb[0].mxu0
    %v715 = vadd.f32 %v674, %v714
    %v716 = vpop.f32.mrb[0].mxu0
    %v717 = vadd.f32 %v676, %v716
    %v718 = vpop.f32.mrb[0].mxu0
    %v719 = vpop.f32.mrb[0].mxu0
    %720 = vdwg.mxu0
    %721 = vmatprep.subr.bf16.mxu0 %v512
    %722 = vmatpush1.bf16.msra.mxu0 %v511
    %723 = vmatprep.subr.bf16.mxu0 %v514
    %724 = vmatpush1.bf16.msra.mxu0 %v513
    %725 = vmatprep.subr.bf16.mxu0 %v516
    %726 = vmatpush1.bf16.msra.mxu0 %v515
    %727 = vmatprep.subr.bf16.mxu0 %v518
    %728 = vmatpush1.bf16.msra.mxu0 %v517
    %729 = vmatprep.subr.bf16.mxu0 %v520
    %730 = vmatpush1.bf16.msra.mxu0 %v519
    %731 = vmatprep.subr.bf16.mxu0 %v522
    %732 = vmatpush1.bf16.msra.mxu0 %v521
    %733 = vmatprep.subr.bf16.mxu0 %v524
    %734 = vmatpush1.bf16.msra.mxu0 %v523
    %735 = vmatprep.subr.bf16.mxu0 %v526
    %736 = vmatpush1.bf16.msra.mxu0 %v525
    %737 = vmatprep.subr.bf16.mxu0 %v528
    %738 = vmatpush1.bf16.msra.mxu0 %v527
    %739 = vmatprep.subr.bf16.mxu0 %v530
    %740 = vmatpush1.bf16.msra.mxu0 %v529
    %741 = vmatprep.subr.bf16.mxu0 %v532
    %742 = vmatpush1.bf16.msra.mxu0 %v531
    %743 = vmatprep.subr.bf16.mxu0 %v534
    %744 = vmatpush1.bf16.msra.mxu0 %v533
    %745 = vmatprep.subr.bf16.mxu0 %v536
    %746 = vmatpush1.bf16.msra.mxu0 %v535
    %747 = vmatprep.subr.bf16.mxu0 %v538
    %748 = vmatpush1.bf16.msra.mxu0 %v537
    %749 = vmatprep.subr.bf16.mxu0 %v540
    %750 = vmatpush1.bf16.msra.mxu0 %v539
    %751 = vmatprep.subr.bf16.mxu0 %v542
    %752 = vmatpush1.bf16.msra.mxu0 %v541
    %753 = vmatprep.mubr.bf16.mxu0 %v62
    %754 = vmatmul.mubr.bf16.gmra.mrb[0].mxu0 %v61
    %v755 = vpop.f32.mrb[0].mxu0
    %v756 = vadd.f32 %v715, %v755
    %v757 = vpop.f32.mrb[0].mxu0
    %v758 = vadd.f32 %v717, %v757
    %v759 = vpop.f32.mrb[0].mxu0
    %v760 = vpop.f32.mrb[0].mxu0
    %761 = vdwg.mxu0
    %v762 = vadd.f32 %v55, %v756
    %v763 = vadd.f32 %v56, %v758
    %764 = vst [vmem:[#allocation2] sm:$0xff] %v762
    %vm765 = vcmask 64512
    %766 = vst.msk [vmem:[#allocation2 + $0x8] sm:$0xff] %vm765, %v763
    // Predicated region
    $region22: #{_lambda_.1} parent=1 // pred_check
      %p767 = pneg %p18
    $region23: #{_lambda_.1} parent=1 // pred_check_branch
      %769 = sbr.rel (%p767) target = $region25
    $region24: #{_lambda_.1} parent=1 // pred_region
      %v770 = vld [vmem:[#allocation2] sm:$0xff]
      %v771 = vld [vmem:[#allocation2 + $0x8] sm:$0xff]
      %v772 = vld [vmem:[%s2] sm:$0x3]
      %v774 = vlaneseq
      %v775 = vshrl.u32 %v774, 7
      %v776 = vsub.s32 0, %v775
      %v777 = vrot.slane %v772, %v776
      %v778 = vlaneseq
      %v779 = vshrl.u32 %v778, 7
      %v780 = vsub.s32 1, %v779
      %v781 = vrot.slane %v772, %v780
      %v784 = vadd.f32 %v770, %v777
      %v785 = vadd.f32 %v771, %v781
      %v786 = vld [vmem:[%s3] sm:$0xff]
      %v787 = vld [vmem:[%s3 + $0x8] sm:$0xff]
      %v788 = vsub.f32 %v784, %v786
      %v789 = vsub.f32 %v785, %v787
      %v790 = vlaneseq
      %v791 = vshrl.u32 %v790, 7
      %vm792 = vcmp.lt.s32.totalorder %v791, 2
      %v793 = vmul.f32 %v788, %v788
      %v794 = vmul.f32 %v789, %v789
      %v795 = vsel %vm792, %v793, 0.0
      %v796 = vsel %vm792, %v794, 0.0
      %v797 = vsel %vm765, %v796, 0.0
      %v798 = vadd.f32 %v795, %v797
      %799 = vadd.xlane.f32.xlu0 %v798
      %v800 = vpop.xlane.xlu0 %799
      %v801 = vrot.slane %v800, 4
      %v802 = vadd.f32 %v800, %v801
      %v803 = vrot.slane %v802, 2
      %v804 = vadd.f32 %v802, %v803
      %v805 = vrot.slane %v804, 1
      %v806 = vadd.f32 %v804, %v805
      %s807 = vtos %v806
      %s808 = smul.f32 %s807, 0.0036764706
      %v809 = vstv %s808
      %vm810 = vcmask 0
      %811 = vst.msk [vmem:[#allocation3] sm:$0x1] %vm810, %v809
    $region25: #{_lambda_.1} parent=1 // pred_fallthru
      _
    // Predicated region
    $region26: #{_lambda_.1} parent=1 // pred_check
      _
    $region27: #{_lambda_.1} parent=1 // pred_check_branch
      %813 = sbr.rel (0) target = $region29
    $region28: #{_lambda_.1} parent=1 // pred_region
      %s815 = ssub.s32 16, 16
      %816 = vsyncadd [#allocation4], %s815
      %s818 = sshll.u32 [#allocation3], 4
      %s819 = int_to_ptr.vmem [resolvable:$true] %s818
      %821 = dma.vmem_to_hbm [thread:$0]  %s819, 16, %s4, [#allocation4]
    $region29: #{_lambda_.1} parent=1 // pred_fallthru
      _
    // Predicated region
    $region30: #{_lambda_.1} parent=1 // pred_check
      _
    $region31: #{_lambda_.1} parent=1 // pred_check_branch
      %823 = sbr.rel (0) target = $region33
    $region32: #{_lambda_.1} parent=1 // pred_region
      %824 = dma.done [#allocation4], 16
    $region33: #{_lambda_.1} parent=1 // pred_fallthru
      _
    %825 = vsyncpa [#allocation4], 1

</llo_original>
